<compile_context>
chip_gen: v6e
topology: v6e:2x2x1
jax: 0.10.0
libtpu: 0.0.40
codegen_flags: <defaults>
</compile_context>

<pallas_src>
import jax
import jax.numpy as jnp
from jax import lax
from jax.experimental import pallas as pl
from jax.experimental.pallas import tpu as pltpu

NUM_CLASSES = 19
C_PAD = 128          # lane-dense padded output width (19 -> 128)
BN_EPS = 1e-5


def _round_up(x, m):
    return ((x + m - 1) // m) * m


def fasttext_kernel(tok_ref,                    # VMEM [TB, L]     int32
                    embed_ref,                  # VMEM [V_pad, E]  bf16 (resident)
                    w1_ref, w2_ref, b2_ref,     # VMEM folded weights (bf16 / f32 bias)
                    w3_ref, b3_ref,
                    prelu_ref,                  # SMEM (1,) f32
                    o_ref):                     # VMEM [TB, C_PAD] f32
    TB, L = tok_ref.shape
    V_pad = embed_ref.shape[0]

    # ---- embedding lookup + sum-pool as ONE MXU matmul per tile ----
    # counts[b, v] = #{l : tokens[b, l] == v};  pooled = counts @ embed.
    tok = tok_ref[...]                                            # [TB, L] int32
    vids = lax.broadcasted_iota(jnp.int32, (TB, V_pad), 1)
    counts = jnp.zeros((TB, V_pad), jnp.float32)
    for l in range(L):                                            # L static & small
        counts = counts + (tok[:, l:l + 1] == vids).astype(jnp.float32)

    pooled = jnp.dot(counts.astype(jnp.bfloat16), embed_ref[...],
                     preferred_element_type=jnp.float32)          # [TB, E]; 1/L folded in w1

    # ---- MLP (mean & eval-mode BN folded into the weights) ----
    a = prelu_ref[0]                                              # shared PReLU slope

    h1 = jnp.dot(pooled.astype(jnp.bfloat16), w1_ref[...],
                 preferred_element_type=jnp.float32)
    h1 = jnp.where(h1 >= 0, h1, a * h1)

    h2 = jnp.dot(h1.astype(jnp.bfloat16), w2_ref[...],
                 preferred_element_type=jnp.float32) + b2_ref[...]
    h2 = jnp.where(h2 >= 0, h2, a * h2)

    o_ref[...] = (jnp.dot(h2.astype(jnp.bfloat16), w3_ref[...],
                          preferred_element_type=jnp.float32) + b3_ref[...])


def fasttext_forward(tokens, params, *, batch_tile=256):
    """tokens: int32 [B, L]; params: dict of arrays. Returns [B, 19] float32."""
    tokens = tokens.astype(jnp.int32)
    B, L = tokens.shape
    embed = params["embed_mat"]                    # [V, E] bf16
    V, E = embed.shape
    F1 = params["w1"].shape[0]
    F2 = params["w2"].shape[0]

    # ---- VMEM-resident embedding table (pad vocab to a lane multiple) ----
    V_pad = _round_up(V, 128)
    table_bytes = V_pad * E * jnp.dtype(embed.dtype).itemsize
    assert table_bytes <= 24 * 1024 * 1024, \
        "embedding table too large for the VMEM-resident path"
    embed_p = jnp.pad(embed, ((0, V_pad - V), (0, 0)))

    # ---- fold eval-mode BN + the 1/L of the mean into the linear weights ----
    def bn_scale_bias(gamma, beta, mean, var):
        s = gamma / jnp.sqrt(var + BN_EPS)
        return s, beta - mean * s

    s1, c1 = bn_scale_bias(params["bn1_gamma"], params["bn1_beta"],
                           params["bn1_mean"], params["bn1_var"])
    s2, c2 = bn_scale_bias(params["bn2_gamma"], params["bn2_beta"],
                           params["bn2_mean"], params["bn2_var"])

    w1f = (params["w1"].T / L).astype(jnp.bfloat16)                  # [E, F1]  mean folded
    w2f = (s1[:, None] * params["w2"].T).astype(jnp.bfloat16)        # [F1, F2] BN1 folded
    b2f = (c1 @ params["w2"].T)[None, :].astype(jnp.float32)         # [1, F2]
    w3f = s2[:, None] * params["w3"].T                               # [F2, 19] BN2 folded
    b3f = (c2 @ params["w3"].T + params["b3"])[None, :]              # [1, 19]

    # lane-dense output: pad 19 -> 128 columns (sliced off after the call)
    w3f = jnp.pad(w3f, ((0, 0), (0, C_PAD - NUM_CLASSES))).astype(jnp.bfloat16)
    b3f = jnp.pad(b3f, ((0, 0), (0, C_PAD - NUM_CLASSES))).astype(jnp.float32)

    prelu = params["prelu"].reshape(1).astype(jnp.float32)

    # ---- batch tiling (pad rows use token 0; results sliced off) ----
    TB = min(batch_tile, _round_up(B, 8))
    if B > 16 and pl.cdiv(B, TB) < 2:          # v7x megacore: keep >= 2 grid tiles
        TB = _round_up(pl.cdiv(B, 2), 8)
    nb = pl.cdiv(B, TB)
    B_pad = nb * TB
    if B_pad != B:
        tokens = jnp.pad(tokens, ((0, B_pad - B), (0, 0)))

    grid_spec = pltpu.PrefetchScalarGridSpec(
        num_scalar_prefetch=0,
        grid=(nb,),
        in_specs=[
            pl.BlockSpec((TB, L), lambda i: (i, 0)),                 # per-tile tokens
            pl.BlockSpec((V_pad, E), lambda i: (0, 0)),              # embed table (VMEM resident)
            pl.BlockSpec((E, F1), lambda i: (0, 0)),                 # w1f
            pl.BlockSpec((F1, F2), lambda i: (0, 0)),                # w2f
            pl.BlockSpec((1, F2), lambda i: (0, 0)),                 # b2f
            pl.BlockSpec((F2, C_PAD), lambda i: (0, 0)),             # w3f
            pl.BlockSpec((1, C_PAD), lambda i: (0, 0)),              # b3f
            pl.BlockSpec(memory_space=pltpu.MemorySpace.SMEM),       # PReLU slope
        ],
        out_specs=pl.BlockSpec((TB, C_PAD), lambda i: (i, 0)),
    )

    flops = 2 * B_pad * (V_pad * E + E * F1 + F1 * F2 + F2 * C_PAD) + B_pad * L * V_pad
    bytes_accessed = (4 * B_pad * L                                   # token ids
                      + table_bytes
                      + 2 * (E * F1 + F1 * F2 + F2 * C_PAD)           # bf16 weights
                      + 4 * (F2 + C_PAD)                              # biases
                      + 4 * B_pad * C_PAD)                            # output

    out = pl.pallas_call(
        fasttext_kernel,
        out_shape=jax.ShapeDtypeStruct((B_pad, C_PAD), jnp.float32),
        grid_spec=grid_spec,
        compiler_params=pltpu.CompilerParams(
            dimension_semantics=("parallel",),
            vmem_limit_bytes=48 * 1024 * 1024,   # < 64 MiB, safe on v7x too
        ),
        cost_estimate=pl.CostEstimate(flops=flops, transcendentals=0,
                                      bytes_accessed=bytes_accessed),
    )(tokens, embed_p, w1f, w2f, b2f, w3f, b3f, prelu)

    return out[:B, :NUM_CLASSES]


def make_params(key, num_word, embed_dim, fc_dim1, fc_dim2):
    ks = jax.random.split(key, 4)

    def xavier(k, shape):  # shape = (out, in), matches nn.Linear.weight
        fan_out, fan_in = shape
        limit = jnp.sqrt(6.0 / (fan_in + fan_out))
        return jax.random.uniform(k, shape, jnp.float32, -limit, limit)

    i1 = jnp.arange(fc_dim1, dtype=jnp.float32)
    i2 = jnp.arange(fc_dim2, dtype=jnp.float32)
    return {
        # bf16 embedding table (MXU-native, halves table VMEM footprint).
        "embed_mat": (0.1 * jax.random.normal(
            ks[0], (num_word, embed_dim), jnp.float32)).astype(jnp.bfloat16),
        "w1": xavier(ks[1], (fc_dim1, embed_dim)),
        "w2": xavier(ks[2], (fc_dim2, fc_dim1)),
        "w3": xavier(ks[3], (NUM_CLASSES, fc_dim2)),
        "b3": 0.01 * jnp.arange(NUM_CLASSES, dtype=jnp.float32),
        "prelu": jnp.array([0.25], jnp.float32),            # nn.PReLU default
        # BatchNorm1d eval-mode stats/affine; deterministic, non-trivial.
        "bn1_gamma": 1.0 + 0.1 * jnp.sin(i1),
        "bn1_beta": 0.1 * jnp.cos(i1),
        "bn1_mean": 0.05 * jnp.cos(i1),
        "bn1_var": 1.0 + 0.1 * jnp.abs(jnp.sin(i1)),
        "bn2_gamma": 1.0 + 0.1 * jnp.sin(i2),
        "bn2_beta": 0.1 * jnp.cos(i2),
        "bn2_mean": 0.05 * jnp.cos(i2),
        "bn2_var": 1.0 + 0.1 * jnp.abs(jnp.sin(i2)),
    }


if __name__ == "__main__":
    # Small, lane-friendly shapes: vocab=100, embed=128, fc1=128, fc2=128.
    B, L = 8, 16
    NUM_WORD, EMBED_DIM, FC_DIM1, FC_DIM2 = 100, 128, 128, 128

    key = jax.random.PRNGKey(0)
    k_tok, k_par = jax.random.split(key)

    params = make_params(k_par, NUM_WORD, EMBED_DIM, FC_DIM1, FC_DIM2)
    tokens = jax.random.randint(k_tok, (B, L), 0, NUM_WORD, dtype=jnp.int32)

    out = jax.jit(fasttext_forward)(tokens, params)
    out = jax.block_until_ready(out)
    assert out.shape == (B, NUM_CLASSES) and out.dtype == jnp.float32

    # Pure-JAX reference: original (unfused) op order, eval-mode semantics.
    hp = lax.Precision.HIGHEST
    emb = jnp.take(params["embed_mat"].astype(jnp.float32), tokens, axis=0)
    x = emb.mean(axis=1)
    a = params["prelu"][0]
    h1 = jnp.dot(x, params["w1"].T, precision=hp)
    h1 = jnp.where(h1 >= 0, h1, a * h1)
    h1 = (h1 - params["bn1_mean"]) / jnp.sqrt(params["bn1_var"] + BN_EPS) \
         * params["bn1_gamma"] + params["bn1_beta"]
    h2 = jnp.dot(h1, params["w2"].T, precision=hp)
    h2 = jnp.where(h2 >= 0, h2, a * h2)
    h2 = (h2 - params["bn2_mean"]) / jnp.sqrt(params["bn2_var"] + BN_EPS) \
         * params["bn2_gamma"] + params["bn2_beta"]
    ref = jnp.dot(h2, params["w3"].T, precision=hp) + params["b3"]

    assert jnp.allclose(out, ref, atol=2e-2, rtol=2e-2), \
        float(jnp.max(jnp.abs(out - ref)))
    print("KERNEL_OK")
</pallas_src>

<mosaic_0001>
module attributes {stable_mosaic.version = 11 : i64} {
  func.func @fasttext_kernel(%arg0: i32, %arg1: memref<8x16xi32, #tpu.memory_space<vmem>>, %arg2: memref<128x128xbf16, #tpu.memory_space<vmem>>, %arg3: memref<128x128xbf16, #tpu.memory_space<vmem>>, %arg4: memref<128x128xbf16, #tpu.memory_space<vmem>>, %arg5: memref<1x128xf32, #tpu.memory_space<vmem>>, %arg6: memref<128x128xbf16, #tpu.memory_space<vmem>>, %arg7: memref<1x128xf32, #tpu.memory_space<vmem>>, %arg8: memref<1xf32, #tpu.memory_space<smem>>, %arg9: memref<8x128xf32, #tpu.memory_space<vmem>>) attributes {dimension_semantics = [#tpu.dimension_semantics<parallel>], iteration_bounds = array<i64: 1>, scalar_prefetch = 0 : i64, scratch_operands = 0 : i64, tpu.core_type = #tpu.core_type<tc>, window_params = [{transform_indices = @transform_0, window_bounds = array<i64: 8, 16>}, {pipeline_mode = #tpu.pipeline_mode<synchronous>, transform_indices = @transform_1, window_bounds = array<i64: 128, 128>}, {pipeline_mode = #tpu.pipeline_mode<synchronous>, transform_indices = @transform_2, window_bounds = array<i64: 128, 128>}, {pipeline_mode = #tpu.pipeline_mode<synchronous>, transform_indices = @transform_3, window_bounds = array<i64: 128, 128>}, {pipeline_mode = #tpu.pipeline_mode<synchronous>, transform_indices = @transform_4, window_bounds = array<i64: 1, 128>}, {pipeline_mode = #tpu.pipeline_mode<synchronous>, transform_indices = @transform_5, window_bounds = array<i64: 128, 128>}, {pipeline_mode = #tpu.pipeline_mode<synchronous>, transform_indices = @transform_6, window_bounds = array<i64: 1, 128>}, {transform_indices = @transform_7, window_bounds = array<i64: 1>}, {transform_indices = @transform_8, window_bounds = array<i64: 8, 128>}]} {
    %c0 = arith.constant 0 : index
    %c0_0 = arith.constant 0 : index
    %0 = vector.load %arg1[%c0, %c0_0] : memref<8x16xi32, #tpu.memory_space<vmem>>, vector<8x16xi32>
    %1 = tpu.iota {dimensions = array<i32: 1>} : vector<8x128xi32>
    %cst = arith.constant 0.000000e+00 : f32
    %2 = vector.broadcast %cst : f32 to vector<8x128xf32>
    %3 = vector.extract_strided_slice %0 {offsets = [0, 0], sizes = [8, 1], strides = [1, 1]} : vector<8x16xi32> to vector<8x1xi32>
    %4 = vector.broadcast %3 : vector<8x1xi32> to vector<8x128xi32>
    %5 = arith.cmpi eq, %4, %1 : vector<8x128xi32>
    %6 = arith.extui %5 : vector<8x128xi1> to vector<8x128xi32>
    %7 = arith.sitofp %6 : vector<8x128xi32> to vector<8x128xf32>
    %8 = arith.addf %2, %7 : vector<8x128xf32>
    %9 = vector.extract_strided_slice %0 {offsets = [0, 1], sizes = [8, 1], strides = [1, 1]} : vector<8x16xi32> to vector<8x1xi32>
    %10 = vector.broadcast %9 : vector<8x1xi32> to vector<8x128xi32>
    %11 = arith.cmpi eq, %10, %1 : vector<8x128xi32>
    %12 = arith.extui %11 : vector<8x128xi1> to vector<8x128xi32>
    %13 = arith.sitofp %12 : vector<8x128xi32> to vector<8x128xf32>
    %14 = arith.addf %8, %13 : vector<8x128xf32>
    %15 = vector.extract_strided_slice %0 {offsets = [0, 2], sizes = [8, 1], strides = [1, 1]} : vector<8x16xi32> to vector<8x1xi32>
    %16 = vector.broadcast %15 : vector<8x1xi32> to vector<8x128xi32>
    %17 = arith.cmpi eq, %16, %1 : vector<8x128xi32>
    %18 = arith.extui %17 : vector<8x128xi1> to vector<8x128xi32>
    %19 = arith.sitofp %18 : vector<8x128xi32> to vector<8x128xf32>
    %20 = arith.addf %14, %19 : vector<8x128xf32>
    %21 = vector.extract_strided_slice %0 {offsets = [0, 3], sizes = [8, 1], strides = [1, 1]} : vector<8x16xi32> to vector<8x1xi32>
    %22 = vector.broadcast %21 : vector<8x1xi32> to vector<8x128xi32>
    %23 = arith.cmpi eq, %22, %1 : vector<8x128xi32>
    %24 = arith.extui %23 : vector<8x128xi1> to vector<8x128xi32>
    %25 = arith.sitofp %24 : vector<8x128xi32> to vector<8x128xf32>
    %26 = arith.addf %20, %25 : vector<8x128xf32>
    %27 = vector.extract_strided_slice %0 {offsets = [0, 4], sizes = [8, 1], strides = [1, 1]} : vector<8x16xi32> to vector<8x1xi32>
    %28 = vector.broadcast %27 : vector<8x1xi32> to vector<8x128xi32>
    %29 = arith.cmpi eq, %28, %1 : vector<8x128xi32>
    %30 = arith.extui %29 : vector<8x128xi1> to vector<8x128xi32>
    %31 = arith.sitofp %30 : vector<8x128xi32> to vector<8x128xf32>
    %32 = arith.addf %26, %31 : vector<8x128xf32>
    %33 = vector.extract_strided_slice %0 {offsets = [0, 5], sizes = [8, 1], strides = [1, 1]} : vector<8x16xi32> to vector<8x1xi32>
    %34 = vector.broadcast %33 : vector<8x1xi32> to vector<8x128xi32>
    %35 = arith.cmpi eq, %34, %1 : vector<8x128xi32>
    %36 = arith.extui %35 : vector<8x128xi1> to vector<8x128xi32>
    %37 = arith.sitofp %36 : vector<8x128xi32> to vector<8x128xf32>
    %38 = arith.addf %32, %37 : vector<8x128xf32>
    %39 = vector.extract_strided_slice %0 {offsets = [0, 6], sizes = [8, 1], strides = [1, 1]} : vector<8x16xi32> to vector<8x1xi32>
    %40 = vector.broadcast %39 : vector<8x1xi32> to vector<8x128xi32>
    %41 = arith.cmpi eq, %40, %1 : vector<8x128xi32>
    %42 = arith.extui %41 : vector<8x128xi1> to vector<8x128xi32>
    %43 = arith.sitofp %42 : vector<8x128xi32> to vector<8x128xf32>
    %44 = arith.addf %38, %43 : vector<8x128xf32>
    %45 = vector.extract_strided_slice %0 {offsets = [0, 7], sizes = [8, 1], strides = [1, 1]} : vector<8x16xi32> to vector<8x1xi32>
    %46 = vector.broadcast %45 : vector<8x1xi32> to vector<8x128xi32>
    %47 = arith.cmpi eq, %46, %1 : vector<8x128xi32>
    %48 = arith.extui %47 : vector<8x128xi1> to vector<8x128xi32>
    %49 = arith.sitofp %48 : vector<8x128xi32> to vector<8x128xf32>
    %50 = arith.addf %44, %49 : vector<8x128xf32>
    %51 = vector.extract_strided_slice %0 {offsets = [0, 8], sizes = [8, 1], strides = [1, 1]} : vector<8x16xi32> to vector<8x1xi32>
    %52 = vector.broadcast %51 : vector<8x1xi32> to vector<8x128xi32>
    %53 = arith.cmpi eq, %52, %1 : vector<8x128xi32>
    %54 = arith.extui %53 : vector<8x128xi1> to vector<8x128xi32>
    %55 = arith.sitofp %54 : vector<8x128xi32> to vector<8x128xf32>
    %56 = arith.addf %50, %55 : vector<8x128xf32>
    %57 = vector.extract_strided_slice %0 {offsets = [0, 9], sizes = [8, 1], strides = [1, 1]} : vector<8x16xi32> to vector<8x1xi32>
    %58 = vector.broadcast %57 : vector<8x1xi32> to vector<8x128xi32>
    %59 = arith.cmpi eq, %58, %1 : vector<8x128xi32>
    %60 = arith.extui %59 : vector<8x128xi1> to vector<8x128xi32>
    %61 = arith.sitofp %60 : vector<8x128xi32> to vector<8x128xf32>
    %62 = arith.addf %56, %61 : vector<8x128xf32>
    %63 = vector.extract_strided_slice %0 {offsets = [0, 10], sizes = [8, 1], strides = [1, 1]} : vector<8x16xi32> to vector<8x1xi32>
    %64 = vector.broadcast %63 : vector<8x1xi32> to vector<8x128xi32>
    %65 = arith.cmpi eq, %64, %1 : vector<8x128xi32>
    %66 = arith.extui %65 : vector<8x128xi1> to vector<8x128xi32>
    %67 = arith.sitofp %66 : vector<8x128xi32> to vector<8x128xf32>
    %68 = arith.addf %62, %67 : vector<8x128xf32>
    %69 = vector.extract_strided_slice %0 {offsets = [0, 11], sizes = [8, 1], strides = [1, 1]} : vector<8x16xi32> to vector<8x1xi32>
    %70 = vector.broadcast %69 : vector<8x1xi32> to vector<8x128xi32>
    %71 = arith.cmpi eq, %70, %1 : vector<8x128xi32>
    %72 = arith.extui %71 : vector<8x128xi1> to vector<8x128xi32>
    %73 = arith.sitofp %72 : vector<8x128xi32> to vector<8x128xf32>
    %74 = arith.addf %68, %73 : vector<8x128xf32>
    %75 = vector.extract_strided_slice %0 {offsets = [0, 12], sizes = [8, 1], strides = [1, 1]} : vector<8x16xi32> to vector<8x1xi32>
    %76 = vector.broadcast %75 : vector<8x1xi32> to vector<8x128xi32>
    %77 = arith.cmpi eq, %76, %1 : vector<8x128xi32>
    %78 = arith.extui %77 : vector<8x128xi1> to vector<8x128xi32>
    %79 = arith.sitofp %78 : vector<8x128xi32> to vector<8x128xf32>
    %80 = arith.addf %74, %79 : vector<8x128xf32>
    %81 = vector.extract_strided_slice %0 {offsets = [0, 13], sizes = [8, 1], strides = [1, 1]} : vector<8x16xi32> to vector<8x1xi32>
    %82 = vector.broadcast %81 : vector<8x1xi32> to vector<8x128xi32>
    %83 = arith.cmpi eq, %82, %1 : vector<8x128xi32>
    %84 = arith.extui %83 : vector<8x128xi1> to vector<8x128xi32>
    %85 = arith.sitofp %84 : vector<8x128xi32> to vector<8x128xf32>
    %86 = arith.addf %80, %85 : vector<8x128xf32>
    %87 = vector.extract_strided_slice %0 {offsets = [0, 14], sizes = [8, 1], strides = [1, 1]} : vector<8x16xi32> to vector<8x1xi32>
    %88 = vector.broadcast %87 : vector<8x1xi32> to vector<8x128xi32>
    %89 = arith.cmpi eq, %88, %1 : vector<8x128xi32>
    %90 = arith.extui %89 : vector<8x128xi1> to vector<8x128xi32>
    %91 = arith.sitofp %90 : vector<8x128xi32> to vector<8x128xf32>
    %92 = arith.addf %86, %91 : vector<8x128xf32>
    %93 = vector.extract_strided_slice %0 {offsets = [0, 15], sizes = [8, 1], strides = [1, 1]} : vector<8x16xi32> to vector<8x1xi32>
    %94 = vector.broadcast %93 : vector<8x1xi32> to vector<8x128xi32>
    %95 = arith.cmpi eq, %94, %1 : vector<8x128xi32>
    %96 = arith.extui %95 : vector<8x128xi1> to vector<8x128xi32>
    %97 = arith.sitofp %96 : vector<8x128xi32> to vector<8x128xf32>
    %98 = arith.addf %92, %97 : vector<8x128xf32>
    %99 = arith.truncf %98 : vector<8x128xf32> to vector<8x128xbf16>
    %c0_1 = arith.constant 0 : index
    %c0_2 = arith.constant 0 : index
    %100 = vector.load %arg2[%c0_1, %c0_2] : memref<128x128xbf16, #tpu.memory_space<vmem>>, vector<128x128xbf16>
    %cst_3 = arith.constant dense<0.000000e+00> : vector<8x128xf32>
    %101 = tpu.matmul %99, %100, %cst_3 {dimension_numbers = #tpu.dot_dimension_numbers<[1], [0], [0], [1], [0, 0, 1, 1], [], []>} : vector<8x128xbf16>, vector<128x128xbf16>, vector<8x128xf32> -> vector<8x128xf32>
    %c0_4 = arith.constant 0 : index
    %102 = memref.load %arg8[%c0_4] : memref<1xf32, #tpu.memory_space<smem>>
    %103 = arith.truncf %101 : vector<8x128xf32> to vector<8x128xbf16>
    %c0_5 = arith.constant 0 : index
    %c0_6 = arith.constant 0 : index
    %104 = vector.load %arg3[%c0_5, %c0_6] : memref<128x128xbf16, #tpu.memory_space<vmem>>, vector<128x128xbf16>
    %cst_7 = arith.constant dense<0.000000e+00> : vector<8x128xf32>
    %105 = tpu.matmul %103, %104, %cst_7 {dimension_numbers = #tpu.dot_dimension_numbers<[1], [0], [0], [1], [0, 0, 1, 1], [], []>} : vector<8x128xbf16>, vector<128x128xbf16>, vector<8x128xf32> -> vector<8x128xf32>
    %cst_8 = arith.constant 0.000000e+00 : f32
    %106 = vector.broadcast %cst_8 : f32 to vector<8x128xf32>
    %107 = arith.cmpf oge, %105, %106 : vector<8x128xf32>
    %108 = vector.broadcast %102 : f32 to vector<8x128xf32>
    %109 = arith.mulf %108, %105 : vector<8x128xf32>
    %110 = arith.select %107, %105, %109 : vector<8x128xi1>, vector<8x128xf32>
    %111 = arith.truncf %110 : vector<8x128xf32> to vector<8x128xbf16>
    %c0_9 = arith.constant 0 : index
    %c0_10 = arith.constant 0 : index
    %112 = vector.load %arg4[%c0_9, %c0_10] : memref<128x128xbf16, #tpu.memory_space<vmem>>, vector<128x128xbf16>
    %cst_11 = arith.constant dense<0.000000e+00> : vector<8x128xf32>
    %113 = tpu.matmul %111, %112, %cst_11 {dimension_numbers = #tpu.dot_dimension_numbers<[1], [0], [0], [1], [0, 0, 1, 1], [], []>} : vector<8x128xbf16>, vector<128x128xbf16>, vector<8x128xf32> -> vector<8x128xf32>
    %c0_12 = arith.constant 0 : index
    %c0_13 = arith.constant 0 : index
    %114 = vector.load %arg5[%c0_12, %c0_13] : memref<1x128xf32, #tpu.memory_space<vmem>>, vector<1x128xf32>
    %115 = vector.broadcast %114 : vector<1x128xf32> to vector<8x128xf32>
    %116 = arith.addf %113, %115 : vector<8x128xf32>
    %cst_14 = arith.constant 0.000000e+00 : f32
    %117 = vector.broadcast %cst_14 : f32 to vector<8x128xf32>
    %118 = arith.cmpf oge, %116, %117 : vector<8x128xf32>
    %119 = vector.broadcast %102 : f32 to vector<8x128xf32>
    %120 = arith.mulf %119, %116 : vector<8x128xf32>
    %121 = arith.select %118, %116, %120 : vector<8x128xi1>, vector<8x128xf32>
    %122 = arith.truncf %121 : vector<8x128xf32> to vector<8x128xbf16>
    %c0_15 = arith.constant 0 : index
    %c0_16 = arith.constant 0 : index
    %123 = vector.load %arg6[%c0_15, %c0_16] : memref<128x128xbf16, #tpu.memory_space<vmem>>, vector<128x128xbf16>
    %cst_17 = arith.constant dense<0.000000e+00> : vector<8x128xf32>
    %124 = tpu.matmul %122, %123, %cst_17 {dimension_numbers = #tpu.dot_dimension_numbers<[1], [0], [0], [1], [0, 0, 1, 1], [], []>} : vector<8x128xbf16>, vector<128x128xbf16>, vector<8x128xf32> -> vector<8x128xf32>
    %c0_18 = arith.constant 0 : index
    %c0_19 = arith.constant 0 : index
    %125 = vector.load %arg7[%c0_18, %c0_19] : memref<1x128xf32, #tpu.memory_space<vmem>>, vector<1x128xf32>
    %126 = vector.broadcast %125 : vector<1x128xf32> to vector<8x128xf32>
    %127 = arith.addf %124, %126 : vector<8x128xf32>
    %c0_20 = arith.constant 0 : index
    %c0_21 = arith.constant 0 : index
    %128 = vector.load %arg9[%c0_20, %c0_21] : memref<8x128xf32, #tpu.memory_space<vmem>>, vector<8x128xf32>
    tpu.vector_store %arg9[%c0_20, %c0_21], %127 {strides = array<i32>} : memref<8x128xf32, #tpu.memory_space<vmem>>, vector<8x128xf32>,
    return
  }
  func.func @transform_0(%arg0: i32) -> (i32, i32) {
    %c0_i32 = arith.constant 0 : i32
    %c0_i32_0 = arith.constant 0 : i32
    return %arg0, %c0_i32 : i32, i32
  }
  func.func @transform_1(%arg0: i32) -> (i32, i32) {
    %c0_i32 = arith.constant 0 : i32
    %c0_i32_0 = arith.constant 0 : i32
    %c0_i32_1 = arith.constant 0 : i32
    return %c0_i32, %c0_i32_0 : i32, i32
  }
  func.func @transform_2(%arg0: i32) -> (i32, i32) {
    %c0_i32 = arith.constant 0 : i32
    %c0_i32_0 = arith.constant 0 : i32
    %c0_i32_1 = arith.constant 0 : i32
    return %c0_i32, %c0_i32_0 : i32, i32
  }
  func.func @transform_3(%arg0: i32) -> (i32, i32) {
    %c0_i32 = arith.constant 0 : i32
    %c0_i32_0 = arith.constant 0 : i32
    %c0_i32_1 = arith.constant 0 : i32
    return %c0_i32, %c0_i32_0 : i32, i32
  }
  func.func @transform_4(%arg0: i32) -> (i32, i32) {
    %c0_i32 = arith.constant 0 : i32
    %c0_i32_0 = arith.constant 0 : i32
    %c0_i32_1 = arith.constant 0 : i32
    return %c0_i32, %c0_i32_0 : i32, i32
  }
  func.func @transform_5(%arg0: i32) -> (i32, i32) {
    %c0_i32 = arith.constant 0 : i32
    %c0_i32_0 = arith.constant 0 : i32
    %c0_i32_1 = arith.constant 0 : i32
    return %c0_i32, %c0_i32_0 : i32, i32
  }
  func.func @transform_6(%arg0: i32) -> (i32, i32) {
    %c0_i32 = arith.constant 0 : i32
    %c0_i32_0 = arith.constant 0 : i32
    %c0_i32_1 = arith.constant 0 : i32
    return %c0_i32, %c0_i32_0 : i32, i32
  }
  func.func @transform_7(%arg0: i32) -> i32 {
    %c0_i32 = arith.constant 0 : i32
    %c0_i32_0 = arith.constant 0 : i32
    return %c0_i32 : i32
  }
  func.func @transform_8(%arg0: i32) -> (i32, i32) {
    %c0_i32 = arith.constant 0 : i32
    %c0_i32_0 = arith.constant 0 : i32
    return %arg0, %c0_i32 : i32, i32
  }
}

</mosaic_0001>

<llo_original>
// kernel: fasttext_forward.1
$region0: #{fasttext_forward.1}
  #allocation0 [shape = 'u32[]', space=smem, size = 0x4, offset = 0x4, fixed_abs, tag = 'smem constant byte address 0x4 - core index']
  #allocation1 [shape = 'u32[144,128]{1,0:T(1,128)}', space=vmem, size = 0x12000, scoped, tag = 'internal scratch']
  #allocation2 [shape = 'f32[1]{0:T(128)S(6)}', space=smem, size = 0x200, scoped, tag = 'scoped memory for fasttext_forward.1']
  %s0 = inlined_call_operand.vmem [shape: s32[8,16], index: 0, kind: input, shape index: {}]
  %s1 = inlined_call_operand.vmem [shape: bf16[128,128], index: 1, kind: input, shape index: {}]
  %s2 = inlined_call_operand.vmem [shape: bf16[128,128], index: 2, kind: input, shape index: {}]
  %s3 = inlined_call_operand.vmem [shape: bf16[128,128], index: 3, kind: input, shape index: {}]
  %s4 = inlined_call_operand.vmem [shape: f32[1,128], index: 4, kind: input, shape index: {}]
  %s5 = inlined_call_operand.vmem [shape: bf16[128,128], index: 5, kind: input, shape index: {}]
  %s6 = inlined_call_operand.vmem [shape: f32[1,128], index: 6, kind: input, shape index: {}]
  %s7 = inlined_call_operand.<no memory space> [shape: f32[1], index: 7, kind: input, shape index: {}]
  %s8 = inlined_call_operand.hbm [shape: f32[8,128], index: 8, kind: output, shape index: {}]
  %s9 = sld [smem:[#allocation0]]
  $region42: #{fasttext_forward.1} parent=0
    _
  %s11 = ssub.s32 1, %s9
  %s12 = scalar_select 0, %s11, %s9
  %13 = sst [smem:[#allocation2]] %s7
  $region1: #{fasttext_forward.1} parent=0
    #allocation3 [shape = 'u8[4096]{0}', space=vmem, size = 0x1000, scoped, tag = 'output window, operand 0, single buffered']
    #allocation4 [shape = 's32[1]{0}', space=sflag, size = 0x4, scoped, tag = 'scoped memory for fasttext_forward.1']
    %14 = vsyncpa [#allocation4], 0
    // Predicated region
    $region2: #{fasttext_forward.1} parent=1 // pred_check
      _
    $region3: #{fasttext_forward.1} parent=1 // pred_check_branch
      %16 = sbr.rel (0) target = $region5
    $region4: #{fasttext_forward.1} parent=1 // pred_region
      _
    $region5: #{fasttext_forward.1} parent=1 // pred_fallthru
      _
    // Predicated region
    $region6: #{fasttext_forward.1} parent=1 // pred_check
      _
    $region7: #{fasttext_forward.1} parent=1 // pred_check_branch
      %18 = sbr.rel (0) target = $region9
    $region8: #{fasttext_forward.1} parent=1 // pred_region
      _
    $region9: #{fasttext_forward.1} parent=1 // pred_fallthru
      _
    // Predicated region
    $region10: #{fasttext_forward.1} parent=1 // pred_check
      _
    $region11: #{fasttext_forward.1} parent=1 // pred_check_branch
      %20 = sbr.rel (0) target = $region13
    $region12: #{fasttext_forward.1} parent=1 // pred_region
      _
    $region13: #{fasttext_forward.1} parent=1 // pred_fallthru
      _
    // Predicated region
    $region14: #{fasttext_forward.1} parent=1 // pred_check
      _
    $region15: #{fasttext_forward.1} parent=1 // pred_check_branch
      %22 = sbr.rel (0) target = $region17
    $region16: #{fasttext_forward.1} parent=1 // pred_region
      _
    $region17: #{fasttext_forward.1} parent=1 // pred_fallthru
      _
    // Predicated region
    $region18: #{fasttext_forward.1} parent=1 // pred_check
      _
    $region19: #{fasttext_forward.1} parent=1 // pred_check_branch
      %24 = sbr.rel (0) target = $region21
    $region20: #{fasttext_forward.1} parent=1 // pred_region
      _
    $region21: #{fasttext_forward.1} parent=1 // pred_fallthru
      _
    // Predicated region
    $region22: #{fasttext_forward.1} parent=1 // pred_check
      _
    $region23: #{fasttext_forward.1} parent=1 // pred_check_branch
      %26 = sbr.rel (0) target = $region25
    $region24: #{fasttext_forward.1} parent=1 // pred_region
      _
    $region25: #{fasttext_forward.1} parent=1 // pred_fallthru
      _
    // Predicated region
    $region26: #{fasttext_forward.1} parent=1 // pred_check
      _
    $region27: #{fasttext_forward.1} parent=1 // pred_check_branch
      %28 = sbr.rel (0) target = $region29
    $region28: #{fasttext_forward.1} parent=1 // pred_region
      _
    $region29: #{fasttext_forward.1} parent=1 // pred_fallthru
      _
    // Predicated region
    $region30: #{fasttext_forward.1} parent=1 // pred_check
      _
    $region31: #{fasttext_forward.1} parent=1 // pred_check_branch
      %30 = sbr.rel (0) target = $region33
    $region32: #{fasttext_forward.1} parent=1 // pred_region
      _
    $region33: #{fasttext_forward.1} parent=1 // pred_fallthru
      _
    %v32 = vld [vmem:[%s0] sm:$0xff]
    %v33 = vlaneseq
    %v34 = vand.u32 %v33, 127
    %35 = vset.pattern.permute.xlu0 0
    %36 = vperm.xlu0 %35, %v32
    %v37 = vpop.permute.xlu0 %36
    %vm38 = vcmp.eq.s32.totalorder %v37, %v34
    %v39 = vsel %vm38, 1, 0
    %v40 = vcvt.s32.f32 %v39
    %v41 = vadd.f32 %v40, 0.0
    %42 = vset.pattern.permute.xlu0 1
    %43 = vperm.xlu0 %42, %v32
    %v44 = vpop.permute.xlu0 %43
    %vm45 = vcmp.eq.s32.totalorder %v44, %v34
    %v46 = vsel %vm45, 1, 0
    %v47 = vcvt.s32.f32 %v46
    %v48 = vadd.f32 %v41, %v47
    %49 = vset.pattern.permute.xlu0 2
    %50 = vperm.xlu0 %49, %v32
    %v51 = vpop.permute.xlu0 %50
    %vm52 = vcmp.eq.s32.totalorder %v51, %v34
    %v53 = vsel %vm52, 1, 0
    %v54 = vcvt.s32.f32 %v53
    %v55 = vadd.f32 %v48, %v54
    %56 = vset.pattern.permute.xlu0 3
    %57 = vperm.xlu0 %56, %v32
    %v58 = vpop.permute.xlu0 %57
    %vm59 = vcmp.eq.s32.totalorder %v58, %v34
    %v60 = vsel %vm59, 1, 0
    %v61 = vcvt.s32.f32 %v60
    %v62 = vadd.f32 %v55, %v61
    %63 = vset.pattern.permute.xlu0 4
    %64 = vperm.xlu0 %63, %v32
    %v65 = vpop.permute.xlu0 %64
    %vm66 = vcmp.eq.s32.totalorder %v65, %v34
    %v67 = vsel %vm66, 1, 0
    %v68 = vcvt.s32.f32 %v67
    %v69 = vadd.f32 %v62, %v68
    %70 = vset.pattern.permute.xlu0 5
    %71 = vperm.xlu0 %70, %v32
    %v72 = vpop.permute.xlu0 %71
    %vm73 = vcmp.eq.s32.totalorder %v72, %v34
    %v74 = vsel %vm73, 1, 0
    %v75 = vcvt.s32.f32 %v74
    %v76 = vadd.f32 %v69, %v75
    %77 = vset.pattern.permute.xlu0 6
    %78 = vperm.xlu0 %77, %v32
    %v79 = vpop.permute.xlu0 %78
    %vm80 = vcmp.eq.s32.totalorder %v79, %v34
    %v81 = vsel %vm80, 1, 0
    %v82 = vcvt.s32.f32 %v81
    %v83 = vadd.f32 %v76, %v82
    %84 = vset.pattern.permute.xlu0 7
    %85 = vperm.xlu0 %84, %v32
    %v86 = vpop.permute.xlu0 %85
    %vm87 = vcmp.eq.s32.totalorder %v86, %v34
    %v88 = vsel %vm87, 1, 0
    %v89 = vcvt.s32.f32 %v88
    %v90 = vadd.f32 %v83, %v89
    %91 = vset.pattern.permute.xlu0 8
    %92 = vperm.xlu0 %91, %v32
    %v93 = vpop.permute.xlu0 %92
    %vm94 = vcmp.eq.s32.totalorder %v93, %v34
    %v95 = vsel %vm94, 1, 0
    %v96 = vcvt.s32.f32 %v95
    %v97 = vadd.f32 %v90, %v96
    %98 = vset.pattern.permute.xlu0 9
    %99 = vperm.xlu0 %98, %v32
    %v100 = vpop.permute.xlu0 %99
    %vm101 = vcmp.eq.s32.totalorder %v100, %v34
    %v102 = vsel %vm101, 1, 0
    %v103 = vcvt.s32.f32 %v102
    %v104 = vadd.f32 %v97, %v103
    %105 = vset.pattern.permute.xlu0 10
    %106 = vperm.xlu0 %105, %v32
    %v107 = vpop.permute.xlu0 %106
    %vm108 = vcmp.eq.s32.totalorder %v107, %v34
    %v109 = vsel %vm108, 1, 0
    %v110 = vcvt.s32.f32 %v109
    %v111 = vadd.f32 %v104, %v110
    %112 = vset.pattern.permute.xlu0 11
    %113 = vperm.xlu0 %112, %v32
    %v114 = vpop.permute.xlu0 %113
    %vm115 = vcmp.eq.s32.totalorder %v114, %v34
    %v116 = vsel %vm115, 1, 0
    %v117 = vcvt.s32.f32 %v116
    %v118 = vadd.f32 %v111, %v117
    %119 = vset.pattern.permute.xlu0 12
    %120 = vperm.xlu0 %119, %v32
    %v121 = vpop.permute.xlu0 %120
    %vm122 = vcmp.eq.s32.totalorder %v121, %v34
    %v123 = vsel %vm122, 1, 0
    %v124 = vcvt.s32.f32 %v123
    %v125 = vadd.f32 %v118, %v124
    %126 = vset.pattern.permute.xlu0 13
    %127 = vperm.xlu0 %126, %v32
    %v128 = vpop.permute.xlu0 %127
    %vm129 = vcmp.eq.s32.totalorder %v128, %v34
    %v130 = vsel %vm129, 1, 0
    %v131 = vcvt.s32.f32 %v130
    %v132 = vadd.f32 %v125, %v131
    %133 = vset.pattern.permute.xlu0 14
    %134 = vperm.xlu0 %133, %v32
    %v135 = vpop.permute.xlu0 %134
    %vm136 = vcmp.eq.s32.totalorder %v135, %v34
    %v137 = vsel %vm136, 1, 0
    %v138 = vcvt.s32.f32 %v137
    %v139 = vadd.f32 %v132, %v138
    %140 = vset.pattern.permute.xlu0 15
    %141 = vperm.xlu0 %140, %v32
    %v142 = vpop.permute.xlu0 %141
    %vm143 = vcmp.eq.s32.totalorder %v142, %v34
    %v144 = vsel %vm143, 1, 0
    %v145 = vcvt.s32.f32 %v144
    %v146 = vadd.f32 %v139, %v145
    %v147 = vpack.c.bf16 %v146, %v146
    %v148 = vld [vmem:[%s1] sm:$0xf]
    %v149 = vld [vmem:[%s1 + $0x4] sm:$0xf]
    %v150 = vld [vmem:[%s1 + $0x8] sm:$0xf]
    %v151 = vld [vmem:[%s1 + $0xc] sm:$0xf]
    %v152 = vld [vmem:[%s1 + $0x10] sm:$0xf]
    %v153 = vld [vmem:[%s1 + $0x14] sm:$0xf]
    %v154 = vld [vmem:[%s1 + $0x18] sm:$0xf]
    %v155 = vld [vmem:[%s1 + $0x1c] sm:$0xf]
    %v156 = vld [vmem:[%s1 + $0x20] sm:$0xf]
    %v157 = vld [vmem:[%s1 + $0x24] sm:$0xf]
    %v158 = vld [vmem:[%s1 + $0x28] sm:$0xf]
    %v159 = vld [vmem:[%s1 + $0x2c] sm:$0xf]
    %v160 = vld [vmem:[%s1 + $0x30] sm:$0xf]
    %v161 = vld [vmem:[%s1 + $0x34] sm:$0xf]
    %v162 = vld [vmem:[%s1 + $0x38] sm:$0xf]
    %v163 = vld [vmem:[%s1 + $0x3c] sm:$0xf]
    %v180 = vunpack.c.l.b16 %v148
    %v181 = vunpack.c.l.b16 %v149
    %v182 = vunpack.c.l.b16 %v150
    %v183 = vunpack.c.l.b16 %v151
    %v184 = vunpack.c.l.b16 %v152
    %v185 = vunpack.c.l.b16 %v153
    %v186 = vunpack.c.l.b16 %v154
    %v187 = vunpack.c.l.b16 %v155
    %v188 = vunpack.c.l.b16 %v156
    %v189 = vunpack.c.l.b16 %v157
    %v190 = vunpack.c.l.b16 %v158
    %v191 = vunpack.c.l.b16 %v159
    %v192 = vunpack.c.l.b16 %v160
    %v193 = vunpack.c.l.b16 %v161
    %v194 = vunpack.c.l.b16 %v162
    %v195 = vunpack.c.l.b16 %v163
    %v196 = vpack.c.b16 %v181, %v180
    %v197 = vpack.c.b16 %v183, %v182
    %v198 = vpack.c.b16 %v185, %v184
    %v199 = vpack.c.b16 %v187, %v186
    %v200 = vpack.c.b16 %v189, %v188
    %v201 = vpack.c.b16 %v191, %v190
    %v202 = vpack.c.b16 %v193, %v192
    %v203 = vpack.c.b16 %v195, %v194
    %212 = vmatprep.subr.bf16.mxu0 0
    %213 = vmatpush1.bf16.msra.mxu0 %v203
    %214 = vmatprep.subr.bf16.mxu0 0
    %215 = vmatpush1.bf16.msra.mxu0 %v202
    %216 = vmatprep.subr.bf16.mxu0 0
    %217 = vmatpush1.bf16.msra.mxu0 %v201
    %218 = vmatprep.subr.bf16.mxu0 0
    %219 = vmatpush1.bf16.msra.mxu0 %v200
    %220 = vmatprep.subr.bf16.mxu0 0
    %221 = vmatpush1.bf16.msra.mxu0 %v199
    %222 = vmatprep.subr.bf16.mxu0 0
    %223 = vmatpush1.bf16.msra.mxu0 %v198
    %224 = vmatprep.subr.bf16.mxu0 0
    %225 = vmatpush1.bf16.msra.mxu0 %v197
    %226 = vmatprep.subr.bf16.mxu0 0
    %227 = vmatpush1.bf16.msra.mxu0 %v196
    %228 = vmatprep.subr.bf16.mxu0 0
    %229 = vmatpush2.bf16.msra.mxu0 0
    %230 = vmatprep.subr.bf16.mxu0 0
    %231 = vmatpush2.bf16.msra.mxu0 0
    %232 = vmatprep.subr.bf16.mxu0 0
    %233 = vmatpush2.bf16.msra.mxu0 0
    %234 = vmatprep.subr.bf16.mxu0 0
    %235 = vmatpush2.bf16.msra.mxu0 0
    %236 = vmatprep.subr.bf16.mxu0 0
    %237 = vmatpush2.bf16.msra.mxu0 0
    %238 = vmatprep.subr.bf16.mxu0 0
    %239 = vmatpush2.bf16.msra.mxu0 0
    %240 = vmatprep.subr.bf16.mxu0 0
    %241 = vmatpush2.bf16.msra.mxu0 0
    %242 = vmatprep.subr.bf16.mxu0 0
    %243 = vmatpush2.bf16.msra.mxu0 0
    %244 = vmatprep.mubr.bf16.mxu0 0
    %245 = vmatmul.mubr.bf16.gmra.mxu0 %v147
    %v246 = vpop.f32.mrf.mxu0
    %v247 = vadd.f32 0.0, %v246
    %v248 = vpop.f32.mrf.mxu0
    %v249 = vpop.f32.mrf.mxu0
    %v250 = vpop.f32.mrf.mxu0
    %251 = vdwg.mxu0
    %s252 = sld [smem:[#allocation2]]
    %v253 = vpack.c.bf16 %v247, %v247
    %v254 = vld [vmem:[%s2] sm:$0xf]
    %v255 = vld [vmem:[%s2 + $0x4] sm:$0xf]
    %v256 = vld [vmem:[%s2 + $0x8] sm:$0xf]
    %v257 = vld [vmem:[%s2 + $0xc] sm:$0xf]
    %v258 = vld [vmem:[%s2 + $0x10] sm:$0xf]
    %v259 = vld [vmem:[%s2 + $0x14] sm:$0xf]
    %v260 = vld [vmem:[%s2 + $0x18] sm:$0xf]
    %v261 = vld [vmem:[%s2 + $0x1c] sm:$0xf]
    %v262 = vld [vmem:[%s2 + $0x20] sm:$0xf]
    %v263 = vld [vmem:[%s2 + $0x24] sm:$0xf]
    %v264 = vld [vmem:[%s2 + $0x28] sm:$0xf]
    %v265 = vld [vmem:[%s2 + $0x2c] sm:$0xf]
    %v266 = vld [vmem:[%s2 + $0x30] sm:$0xf]
    %v267 = vld [vmem:[%s2 + $0x34] sm:$0xf]
    %v268 = vld [vmem:[%s2 + $0x38] sm:$0xf]
    %v269 = vld [vmem:[%s2 + $0x3c] sm:$0xf]
    %v286 = vunpack.c.l.b16 %v254
    %v287 = vunpack.c.l.b16 %v255
    %v288 = vunpack.c.l.b16 %v256
    %v289 = vunpack.c.l.b16 %v257
    %v290 = vunpack.c.l.b16 %v258
    %v291 = vunpack.c.l.b16 %v259
    %v292 = vunpack.c.l.b16 %v260
    %v293 = vunpack.c.l.b16 %v261
    %v294 = vunpack.c.l.b16 %v262
    %v295 = vunpack.c.l.b16 %v263
    %v296 = vunpack.c.l.b16 %v264
    %v297 = vunpack.c.l.b16 %v265
    %v298 = vunpack.c.l.b16 %v266
    %v299 = vunpack.c.l.b16 %v267
    %v300 = vunpack.c.l.b16 %v268
    %v301 = vunpack.c.l.b16 %v269
    %v302 = vpack.c.b16 %v287, %v286
    %v303 = vpack.c.b16 %v289, %v288
    %v304 = vpack.c.b16 %v291, %v290
    %v305 = vpack.c.b16 %v293, %v292
    %v306 = vpack.c.b16 %v295, %v294
    %v307 = vpack.c.b16 %v297, %v296
    %v308 = vpack.c.b16 %v299, %v298
    %v309 = vpack.c.b16 %v301, %v300
    %318 = vmatprep.subr.bf16.mxu0 0
    %319 = vmatpush1.bf16.msra.mxu0 %v309
    %320 = vmatprep.subr.bf16.mxu0 0
    %321 = vmatpush1.bf16.msra.mxu0 %v308
    %322 = vmatprep.subr.bf16.mxu0 0
    %323 = vmatpush1.bf16.msra.mxu0 %v307
    %324 = vmatprep.subr.bf16.mxu0 0
    %325 = vmatpush1.bf16.msra.mxu0 %v306
    %326 = vmatprep.subr.bf16.mxu0 0
    %327 = vmatpush1.bf16.msra.mxu0 %v305
    %328 = vmatprep.subr.bf16.mxu0 0
    %329 = vmatpush1.bf16.msra.mxu0 %v304
    %330 = vmatprep.subr.bf16.mxu0 0
    %331 = vmatpush1.bf16.msra.mxu0 %v303
    %332 = vmatprep.subr.bf16.mxu0 0
    %333 = vmatpush1.bf16.msra.mxu0 %v302
    %334 = vmatprep.subr.bf16.mxu0 0
    %335 = vmatpush2.bf16.msra.mxu0 0
    %336 = vmatprep.subr.bf16.mxu0 0
    %337 = vmatpush2.bf16.msra.mxu0 0
    %338 = vmatprep.subr.bf16.mxu0 0
    %339 = vmatpush2.bf16.msra.mxu0 0
    %340 = vmatprep.subr.bf16.mxu0 0
    %341 = vmatpush2.bf16.msra.mxu0 0
    %342 = vmatprep.subr.bf16.mxu0 0
    %343 = vmatpush2.bf16.msra.mxu0 0
    %344 = vmatprep.subr.bf16.mxu0 0
    %345 = vmatpush2.bf16.msra.mxu0 0
    %346 = vmatprep.subr.bf16.mxu0 0
    %347 = vmatpush2.bf16.msra.mxu0 0
    %348 = vmatprep.subr.bf16.mxu0 0
    %349 = vmatpush2.bf16.msra.mxu0 0
    %350 = vmatprep.mubr.bf16.mxu0 0
    %351 = vmatmul.mubr.bf16.gmra.mxu0 %v253
    %v352 = vpop.f32.mrf.mxu0
    %v353 = vadd.f32 0.0, %v352
    %v354 = vpop.f32.mrf.mxu0
    %v355 = vpop.f32.mrf.mxu0
    %v356 = vpop.f32.mrf.mxu0
    %357 = vdwg.mxu0
    %vm358 = vcmp.ge.f32.partialorder %v353, 0.0
    %v359 = vstv %s252
    %v360 = vmul.f32 %v359, %v353
    %v361 = vsel %vm358, %v353, %v360
    %v362 = vpack.c.bf16 %v361, %v361
    %v363 = vld [vmem:[%s3] sm:$0xf]
    %v364 = vld [vmem:[%s3 + $0x4] sm:$0xf]
    %v365 = vld [vmem:[%s3 + $0x8] sm:$0xf]
    %v366 = vld [vmem:[%s3 + $0xc] sm:$0xf]
    %v367 = vld [vmem:[%s3 + $0x10] sm:$0xf]
    %v368 = vld [vmem:[%s3 + $0x14] sm:$0xf]
    %v369 = vld [vmem:[%s3 + $0x18] sm:$0xf]
    %v370 = vld [vmem:[%s3 + $0x1c] sm:$0xf]
    %v371 = vld [vmem:[%s3 + $0x20] sm:$0xf]
    %v372 = vld [vmem:[%s3 + $0x24] sm:$0xf]
    %v373 = vld [vmem:[%s3 + $0x28] sm:$0xf]
    %v374 = vld [vmem:[%s3 + $0x2c] sm:$0xf]
    %v375 = vld [vmem:[%s3 + $0x30] sm:$0xf]
    %v376 = vld [vmem:[%s3 + $0x34] sm:$0xf]
    %v377 = vld [vmem:[%s3 + $0x38] sm:$0xf]
    %v378 = vld [vmem:[%s3 + $0x3c] sm:$0xf]
    %v379 = vld [vmem:[%s4] sm:$0x1]
    %v381 = vlaneseq
    %v382 = vshrl.u32 %v381, 7
    %v383 = vsub.s32 0, %v382
    %v384 = vrot.slane %v379, %v383
    %v402 = vunpack.c.l.b16 %v363
    %v403 = vunpack.c.l.b16 %v364
    %v404 = vunpack.c.l.b16 %v365
    %v405 = vunpack.c.l.b16 %v366
    %v406 = vunpack.c.l.b16 %v367
    %v407 = vunpack.c.l.b16 %v368
    %v408 = vunpack.c.l.b16 %v369
    %v409 = vunpack.c.l.b16 %v370
    %v410 = vunpack.c.l.b16 %v371
    %v411 = vunpack.c.l.b16 %v372
    %v412 = vunpack.c.l.b16 %v373
    %v413 = vunpack.c.l.b16 %v374
    %v414 = vunpack.c.l.b16 %v375
    %v415 = vunpack.c.l.b16 %v376
    %v416 = vunpack.c.l.b16 %v377
    %v417 = vunpack.c.l.b16 %v378
    %v418 = vpack.c.b16 %v403, %v402
    %v419 = vpack.c.b16 %v405, %v404
    %v420 = vpack.c.b16 %v407, %v406
    %v421 = vpack.c.b16 %v409, %v408
    %v422 = vpack.c.b16 %v411, %v410
    %v423 = vpack.c.b16 %v413, %v412
    %v424 = vpack.c.b16 %v415, %v414
    %v425 = vpack.c.b16 %v417, %v416
    %434 = vmatprep.subr.bf16.mxu0 0
    %435 = vmatpush1.bf16.msra.mxu0 %v425
    %436 = vmatprep.subr.bf16.mxu0 0
    %437 = vmatpush1.bf16.msra.mxu0 %v424
    %438 = vmatprep.subr.bf16.mxu0 0
    %439 = vmatpush1.bf16.msra.mxu0 %v423
    %440 = vmatprep.subr.bf16.mxu0 0
    %441 = vmatpush1.bf16.msra.mxu0 %v422
    %442 = vmatprep.subr.bf16.mxu0 0
    %443 = vmatpush1.bf16.msra.mxu0 %v421
    %444 = vmatprep.subr.bf16.mxu0 0
    %445 = vmatpush1.bf16.msra.mxu0 %v420
    %446 = vmatprep.subr.bf16.mxu0 0
    %447 = vmatpush1.bf16.msra.mxu0 %v419
    %448 = vmatprep.subr.bf16.mxu0 0
    %449 = vmatpush1.bf16.msra.mxu0 %v418
    %450 = vmatprep.subr.bf16.mxu0 0
    %451 = vmatpush2.bf16.msra.mxu0 0
    %452 = vmatprep.subr.bf16.mxu0 0
    %453 = vmatpush2.bf16.msra.mxu0 0
    %454 = vmatprep.subr.bf16.mxu0 0
    %455 = vmatpush2.bf16.msra.mxu0 0
    %456 = vmatprep.subr.bf16.mxu0 0
    %457 = vmatpush2.bf16.msra.mxu0 0
    %458 = vmatprep.subr.bf16.mxu0 0
    %459 = vmatpush2.bf16.msra.mxu0 0
    %460 = vmatprep.subr.bf16.mxu0 0
    %461 = vmatpush2.bf16.msra.mxu0 0
    %462 = vmatprep.subr.bf16.mxu0 0
    %463 = vmatpush2.bf16.msra.mxu0 0
    %464 = vmatprep.subr.bf16.mxu0 0
    %465 = vmatpush2.bf16.msra.mxu0 0
    %466 = vmatprep.mubr.bf16.mxu0 0
    %467 = vmatmul.mubr.bf16.gmra.mxu0 %v362
    %v468 = vpop.f32.mrf.mxu0
    %v469 = vadd.f32 %v384, %v468
    %v470 = vpop.f32.mrf.mxu0
    %v471 = vpop.f32.mrf.mxu0
    %v472 = vpop.f32.mrf.mxu0
    %473 = vdwg.mxu0
    %vm474 = vcmp.ge.f32.partialorder %v469, 0.0
    %v475 = vmul.f32 %v359, %v469
    %v476 = vsel %vm474, %v469, %v475
    %v477 = vpack.c.bf16 %v476, %v476
    %v478 = vld [vmem:[%s5] sm:$0xf]
    %v479 = vld [vmem:[%s5 + $0x4] sm:$0xf]
    %v480 = vld [vmem:[%s5 + $0x8] sm:$0xf]
    %v481 = vld [vmem:[%s5 + $0xc] sm:$0xf]
    %v482 = vld [vmem:[%s5 + $0x10] sm:$0xf]
    %v483 = vld [vmem:[%s5 + $0x14] sm:$0xf]
    %v484 = vld [vmem:[%s5 + $0x18] sm:$0xf]
    %v485 = vld [vmem:[%s5 + $0x1c] sm:$0xf]
    %v486 = vld [vmem:[%s5 + $0x20] sm:$0xf]
    %v487 = vld [vmem:[%s5 + $0x24] sm:$0xf]
    %v488 = vld [vmem:[%s5 + $0x28] sm:$0xf]
    %v489 = vld [vmem:[%s5 + $0x2c] sm:$0xf]
    %v490 = vld [vmem:[%s5 + $0x30] sm:$0xf]
    %v491 = vld [vmem:[%s5 + $0x34] sm:$0xf]
    %v492 = vld [vmem:[%s5 + $0x38] sm:$0xf]
    %v493 = vld [vmem:[%s5 + $0x3c] sm:$0xf]
    %v494 = vld [vmem:[%s6] sm:$0x1]
    %v496 = vlaneseq
    %v497 = vshrl.u32 %v496, 7
    %v498 = vsub.s32 0, %v497
    %v499 = vrot.slane %v494, %v498
    %v517 = vunpack.c.l.b16 %v478
    %v518 = vunpack.c.l.b16 %v479
    %v519 = vunpack.c.l.b16 %v480
    %v520 = vunpack.c.l.b16 %v481
    %v521 = vunpack.c.l.b16 %v482
    %v522 = vunpack.c.l.b16 %v483
    %v523 = vunpack.c.l.b16 %v484
    %v524 = vunpack.c.l.b16 %v485
    %v525 = vunpack.c.l.b16 %v486
    %v526 = vunpack.c.l.b16 %v487
    %v527 = vunpack.c.l.b16 %v488
    %v528 = vunpack.c.l.b16 %v489
    %v529 = vunpack.c.l.b16 %v490
    %v530 = vunpack.c.l.b16 %v491
    %v531 = vunpack.c.l.b16 %v492
    %v532 = vunpack.c.l.b16 %v493
    %v533 = vpack.c.b16 %v518, %v517
    %v534 = vpack.c.b16 %v520, %v519
    %v535 = vpack.c.b16 %v522, %v521
    %v536 = vpack.c.b16 %v524, %v523
    %v537 = vpack.c.b16 %v526, %v525
    %v538 = vpack.c.b16 %v528, %v527
    %v539 = vpack.c.b16 %v530, %v529
    %v540 = vpack.c.b16 %v532, %v531
    %549 = vmatprep.subr.bf16.mxu0 0
    %550 = vmatpush1.bf16.msra.mxu0 %v540
    %551 = vmatprep.subr.bf16.mxu0 0
    %552 = vmatpush1.bf16.msra.mxu0 %v539
    %553 = vmatprep.subr.bf16.mxu0 0
    %554 = vmatpush1.bf16.msra.mxu0 %v538
    %555 = vmatprep.subr.bf16.mxu0 0
    %556 = vmatpush1.bf16.msra.mxu0 %v537
    %557 = vmatprep.subr.bf16.mxu0 0
    %558 = vmatpush1.bf16.msra.mxu0 %v536
    %559 = vmatprep.subr.bf16.mxu0 0
    %560 = vmatpush1.bf16.msra.mxu0 %v535
    %561 = vmatprep.subr.bf16.mxu0 0
    %562 = vmatpush1.bf16.msra.mxu0 %v534
    %563 = vmatprep.subr.bf16.mxu0 0
    %564 = vmatpush1.bf16.msra.mxu0 %v533
    %565 = vmatprep.subr.bf16.mxu0 0
    %566 = vmatpush2.bf16.msra.mxu0 0
    %567 = vmatprep.subr.bf16.mxu0 0
    %568 = vmatpush2.bf16.msra.mxu0 0
    %569 = vmatprep.subr.bf16.mxu0 0
    %570 = vmatpush2.bf16.msra.mxu0 0
    %571 = vmatprep.subr.bf16.mxu0 0
    %572 = vmatpush2.bf16.msra.mxu0 0
    %573 = vmatprep.subr.bf16.mxu0 0
    %574 = vmatpush2.bf16.msra.mxu0 0
    %575 = vmatprep.subr.bf16.mxu0 0
    %576 = vmatpush2.bf16.msra.mxu0 0
    %577 = vmatprep.subr.bf16.mxu0 0
    %578 = vmatpush2.bf16.msra.mxu0 0
    %579 = vmatprep.subr.bf16.mxu0 0
    %580 = vmatpush2.bf16.msra.mxu0 0
    %581 = vmatprep.mubr.bf16.mxu0 0
    %582 = vmatmul.mubr.bf16.gmra.mxu0 %v477
    %v583 = vpop.f32.mrf.mxu0
    %v584 = vadd.f32 %v499, %v583
    %v585 = vpop.f32.mrf.mxu0
    %v586 = vpop.f32.mrf.mxu0
    %v587 = vpop.f32.mrf.mxu0
    %588 = vdwg.mxu0
    %589 = vst [vmem:[#allocation3] sm:$0xff] %v584
    // Predicated region
    $region34: #{fasttext_forward.1} parent=1 // pred_check
      _
    $region35: #{fasttext_forward.1} parent=1 // pred_check_branch
      %591 = sbr.rel (0) target = $region37
    $region36: #{fasttext_forward.1} parent=1 // pred_region
      %s593 = ssub.s32 128, 128
      %594 = vsyncadd [#allocation4], %s593
      %s596 = sshll.u32 [#allocation3], 4
      %s597 = int_to_ptr.vmem [resolvable:$true] %s596
      %599 = dma.vmem_to_hbm [thread:$0]  %s597, 128, %s8, [#allocation4]
    $region37: #{fasttext_forward.1} parent=1 // pred_fallthru
      _
    // Predicated region
    $region38: #{fasttext_forward.1} parent=1 // pred_check
      _
    $region39: #{fasttext_forward.1} parent=1 // pred_check_branch
      %601 = sbr.rel (0) target = $region41
    $region40: #{fasttext_forward.1} parent=1 // pred_region
      %602 = dma.done [#allocation4], 128
    $region41: #{fasttext_forward.1} parent=1 // pred_fallthru
      _
    %603 = vsyncpa [#allocation4], 1

</llo_original>
